<compile_context>
chip_gen: v5e
topology: v5e:2x2
jax: 0.10.0
libtpu: 0.0.40
codegen_flags: <defaults>
</compile_context>

<pallas_src>
import functools

import jax
import jax.numpy as jnp
from jax.experimental import pallas as pl
from jax.experimental.pallas import tpu as pltpu

D_MODEL = 64
D_HIDDEN = 4 * D_MODEL     # 256
PACK = 2                   # 2 logical 64-wide rows ride in one 128-lane physical row
D_IN = D_MODEL * PACK      # 128
D_HID = D_HIDDEN * PACK    # 512
D_OUT = D_MODEL * PACK     # 128


def ffn_kernel(x_ref, w1_ref, b1_ref, w2_ref, b2_ref, o_ref):
    # x_ref: (tm, 128) row tile (f32 or bf16); w*_ref: full bf16 block-diagonal
    # weights (constant index_map -> VMEM-resident across grid steps);
    # b*_ref: full f32 biases.
    x = x_ref[...].astype(jnp.bfloat16)                        # feed MXU in bf16
    h = jnp.dot(x, w1_ref[...], preferred_element_type=jnp.float32)
    h = jnp.maximum(h + b1_ref[...], 0.0)                      # bias + ReLU in f32
    y = jnp.dot(h.astype(jnp.bfloat16), w2_ref[...],
                preferred_element_type=jnp.float32)
    o_ref[...] = (y + b2_ref[...]).astype(o_ref.dtype)         # dropout == identity


def pack_params(w1, b1, w2, b2):
    """Build lane-dense block-diagonal weights. Call ONCE and reuse (hoisted out
    of the per-call path). Weights bf16 for the MXU; biases f32 for the VPU."""
    z1 = jnp.zeros_like(w1)
    z2 = jnp.zeros_like(w2)
    w1p = jnp.block([[w1, z1], [z1, w1]]).astype(jnp.bfloat16)   # (128, 512)
    w2p = jnp.block([[w2, z2], [z2, w2]]).astype(jnp.bfloat16)   # (512, 128)
    b1p = jnp.concatenate([b1, b1]).reshape(1, -1).astype(jnp.float32)   # (1, 512)
    b2p = jnp.concatenate([b2, b2]).reshape(1, -1).astype(jnp.float32)   # (1, 128)
    return w1p, b1p, w2p, b2p


def _pick_row_tile(rows, tm_max=2048):
    """Row tile for the packed 2-D slab. Small inputs: single grid step (no
    pipeline machinery). Large inputs: prefer an EVEN step count (balanced
    megacore split on v7x), then the largest tile (fewest per-step overheads)."""
    if rows <= 1024:
        return rows
    cands = [t for t in (2048, 1024, 512, 256, 128)
             if t <= tm_max and pl.cdiv(rows, t) >= 2]
    if not cands:
        return 128
    even = [t for t in cands if pl.cdiv(rows, t) % 2 == 0]
    return (even or cands)[0]


@functools.partial(jax.jit, static_argnames=("tm_max",))
def feed_forward(x, w1p, b1p, w2p, b2p, *, tm_max=2048):
    """x: (B, T, 64) f32 or bf16 -> same dtype (eval-mode FFN).
    Pass bf16 activations to halve HBM traffic (kernel casts for the MXU)."""
    B, T, D = x.shape
    assert D == D_MODEL
    M = B * T

    x2d = x.reshape(M, D)
    if M % 2:  # rare: pad ONE logical row so the lane-dense pack=2 layout always applies
        x2d = jnp.pad(x2d, ((0, 1), (0, 0)))
    rows = x2d.shape[0] // PACK
    x2d = x2d.reshape(rows, D_IN)            # free row-major reshape, 128-lane rows

    tm = _pick_row_tile(rows, tm_max)
    grid = (pl.cdiv(rows, tm),)              # ragged final block masked by Pallas (no jnp.pad copy)

    out2d = pl.pallas_call(
        ffn_kernel,
        out_shape=jax.ShapeDtypeStruct((rows, D_OUT), x.dtype),
        grid=grid,
        in_specs=[
            pl.BlockSpec((tm, D_IN), lambda i: (i, 0)),       # x rows (streamed)
            pl.BlockSpec((D_IN, D_HID), lambda i: (0, 0)),    # W1 (VMEM-resident)
            pl.BlockSpec((1, D_HID), lambda i: (0, 0)),       # b1
            pl.BlockSpec((D_HID, D_OUT), lambda i: (0, 0)),   # W2 (VMEM-resident)
            pl.BlockSpec((1, D_OUT), lambda i: (0, 0)),       # b2
        ],
        out_specs=pl.BlockSpec((tm, D_OUT), lambda i: (i, 0)),
        compiler_params=pltpu.CompilerParams(
            dimension_semantics=("parallel",),
            vmem_limit_bytes=32 * 1024 * 1024),
    )(x2d, w1p, b1p, w2p, b2p)

    out = out2d.reshape(-1, D_MODEL)
    if M % 2:
        out = out[:M]
    return out.reshape(B, T, D_MODEL)


def init_params(key):
    """Deterministic init mirroring nn.Linear shapes (stored as (in, out))."""
    k1, k2, k3, k4 = jax.random.split(key, 4)
    bound1 = 1.0 / (D_MODEL ** 0.5)
    bound2 = 1.0 / (D_HIDDEN ** 0.5)
    w1 = jax.random.uniform(k1, (D_MODEL, D_HIDDEN), jnp.float32, -bound1, bound1)
    b1 = jax.random.uniform(k2, (D_HIDDEN,), jnp.float32, -bound1, bound1)
    w2 = jax.random.uniform(k3, (D_HIDDEN, D_MODEL), jnp.float32, -bound2, bound2)
    b2 = jax.random.uniform(k4, (D_MODEL,), jnp.float32, -bound2, bound2)
    return w1, b1, w2, b2


if __name__ == "__main__":
    key = jax.random.PRNGKey(0)
    kx, kp, kx2, kx3 = jax.random.split(key, 4)
    w1, b1, w2, b2 = init_params(kp)
    packed = pack_params(w1, b1, w2, b2)   # hoisted: packed ONCE, reused per call

    def reference_f32(x):
        xf = x.astype(jnp.float32).reshape(-1, D_MODEL)
        h = jnp.maximum(xf @ w1 + b1, 0.0)
        return (h @ w2 + b2).reshape(x.shape)

    def reference_bf16(x):
        xb = x.reshape(-1, D_MODEL).astype(jnp.bfloat16)
        h = jnp.dot(xb, w1.astype(jnp.bfloat16),
                    preferred_element_type=jnp.float32) + b1
        h = jnp.maximum(h, 0.0)
        y = jnp.dot(h.astype(jnp.bfloat16), w2.astype(jnp.bfloat16),
                    preferred_element_type=jnp.float32) + b2
        return y.reshape(x.shape)

    # 1) Small f32 shape consistent with the module (d_model fixed at 64).
    B, T = 2, 8
    x = jax.random.normal(kx, (B, T, D_MODEL), jnp.float32)
    out = jax.block_until_ready(feed_forward(x, *packed))
    assert out.shape == (B, T, D_MODEL) and out.dtype == jnp.float32
    assert jnp.allclose(out, reference_bf16(x), atol=1e-3, rtol=1e-3)
    assert jnp.allclose(out, reference_f32(x), atol=2e-2, rtol=2e-2)

    # 2) Larger bf16 shape: halved HBM I/O, multi-step pipelined path
    #    (4096 logical rows -> 2048 packed rows -> tm=1024 -> 2 parallel steps).
    B2, T2 = 4, 1024
    x2 = jax.random.normal(kx2, (B2, T2, D_MODEL), jnp.float32).astype(jnp.bfloat16)
    out2 = jax.block_until_ready(feed_forward(x2, *packed))
    assert out2.shape == (B2, T2, D_MODEL) and out2.dtype == jnp.bfloat16
    ref2 = reference_bf16(x2).astype(jnp.float32)
    assert jnp.allclose(out2.astype(jnp.float32), ref2, atol=1e-2, rtol=1e-2)

    # 3) Odd-M path (single-row pad keeps the lane-dense pack=2 layout).
    B3, T3 = 1, 9
    x3 = jax.random.normal(kx3, (B3, T3, D_MODEL), jnp.float32)
    out3 = jax.block_until_ready(feed_forward(x3, *packed))
    assert out3.shape == (B3, T3, D_MODEL)
    assert jnp.allclose(out3, reference_f32(x3), atol=2e-2, rtol=2e-2)

    print("KERNEL_OK")
</pallas_src>

<mosaic_0001>
module attributes {stable_mosaic.version = 11 : i64} {
  func.func @ffn_kernel(%arg0: i32, %arg1: memref<8x128xf32, #tpu.memory_space<vmem>>, %arg2: memref<128x512xbf16, #tpu.memory_space<vmem>>, %arg3: memref<1x512xf32, #tpu.memory_space<vmem>>, %arg4: memref<512x128xbf16, #tpu.memory_space<vmem>>, %arg5: memref<1x128xf32, #tpu.memory_space<vmem>>, %arg6: memref<8x128xf32, #tpu.memory_space<vmem>>) attributes {dimension_semantics = [#tpu.dimension_semantics<parallel>], iteration_bounds = array<i64: 1>, scalar_prefetch = 0 : i64, scratch_operands = 0 : i64, tpu.core_type = #tpu.core_type<tc>, window_params = [{transform_indices = @transform_0, window_bounds = array<i64: 8, 128>}, {pipeline_mode = #tpu.pipeline_mode<synchronous>, transform_indices = @transform_1, window_bounds = array<i64: 128, 512>}, {pipeline_mode = #tpu.pipeline_mode<synchronous>, transform_indices = @transform_2, window_bounds = array<i64: 1, 512>}, {pipeline_mode = #tpu.pipeline_mode<synchronous>, transform_indices = @transform_3, window_bounds = array<i64: 512, 128>}, {pipeline_mode = #tpu.pipeline_mode<synchronous>, transform_indices = @transform_4, window_bounds = array<i64: 1, 128>}, {transform_indices = @transform_5, window_bounds = array<i64: 8, 128>}]} {
    %c0 = arith.constant 0 : index
    %c0_0 = arith.constant 0 : index
    %0 = vector.load %arg1[%c0, %c0_0] : memref<8x128xf32, #tpu.memory_space<vmem>>, vector<8x128xf32>
    %1 = arith.truncf %0 : vector<8x128xf32> to vector<8x128xbf16>
    %c0_1 = arith.constant 0 : index
    %c0_2 = arith.constant 0 : index
    %2 = vector.load %arg2[%c0_1, %c0_2] : memref<128x512xbf16, #tpu.memory_space<vmem>>, vector<128x512xbf16>
    %cst = arith.constant dense<0.000000e+00> : vector<8x512xf32>
    %3 = tpu.matmul %1, %2, %cst {dimension_numbers = #tpu.dot_dimension_numbers<[1], [0], [0], [1], [0, 0, 1, 1], [], []>} : vector<8x128xbf16>, vector<128x512xbf16>, vector<8x512xf32> -> vector<8x512xf32>
    %c0_3 = arith.constant 0 : index
    %c0_4 = arith.constant 0 : index
    %4 = vector.load %arg3[%c0_3, %c0_4] : memref<1x512xf32, #tpu.memory_space<vmem>>, vector<1x512xf32>
    %5 = vector.broadcast %4 : vector<1x512xf32> to vector<8x512xf32>
    %6 = arith.addf %3, %5 : vector<8x512xf32>
    %cst_5 = arith.constant 0.000000e+00 : f32
    %7 = vector.broadcast %cst_5 : f32 to vector<8x512xf32>
    %8 = arith.maximumf %6, %7 : vector<8x512xf32>
    %9 = arith.truncf %8 : vector<8x512xf32> to vector<8x512xbf16>
    %c0_6 = arith.constant 0 : index
    %c0_7 = arith.constant 0 : index
    %10 = vector.load %arg4[%c0_6, %c0_7] : memref<512x128xbf16, #tpu.memory_space<vmem>>, vector<512x128xbf16>
    %cst_8 = arith.constant dense<0.000000e+00> : vector<8x128xf32>
    %11 = tpu.matmul %9, %10, %cst_8 {dimension_numbers = #tpu.dot_dimension_numbers<[1], [0], [0], [1], [0, 0, 1, 1], [], []>} : vector<8x512xbf16>, vector<512x128xbf16>, vector<8x128xf32> -> vector<8x128xf32>
    %c0_9 = arith.constant 0 : index
    %c0_10 = arith.constant 0 : index
    %12 = vector.load %arg5[%c0_9, %c0_10] : memref<1x128xf32, #tpu.memory_space<vmem>>, vector<1x128xf32>
    %13 = vector.broadcast %12 : vector<1x128xf32> to vector<8x128xf32>
    %14 = arith.addf %11, %13 : vector<8x128xf32>
    %c0_11 = arith.constant 0 : index
    %c0_12 = arith.constant 0 : index
    %15 = vector.load %arg6[%c0_11, %c0_12] : memref<8x128xf32, #tpu.memory_space<vmem>>, vector<8x128xf32>
    tpu.vector_store %arg6[%c0_11, %c0_12], %14 {strides = array<i32>} : memref<8x128xf32, #tpu.memory_space<vmem>>, vector<8x128xf32>,
    return
  }
  func.func @transform_0(%arg0: i32) -> (i32, i32) {
    %c0_i32 = arith.constant 0 : i32
    %c0_i32_0 = arith.constant 0 : i32
    return %arg0, %c0_i32 : i32, i32
  }
  func.func @transform_1(%arg0: i32) -> (i32, i32) {
    %c0_i32 = arith.constant 0 : i32
    %c0_i32_0 = arith.constant 0 : i32
    %c0_i32_1 = arith.constant 0 : i32
    return %c0_i32, %c0_i32_0 : i32, i32
  }
  func.func @transform_2(%arg0: i32) -> (i32, i32) {
    %c0_i32 = arith.constant 0 : i32
    %c0_i32_0 = arith.constant 0 : i32
    %c0_i32_1 = arith.constant 0 : i32
    return %c0_i32, %c0_i32_0 : i32, i32
  }
  func.func @transform_3(%arg0: i32) -> (i32, i32) {
    %c0_i32 = arith.constant 0 : i32
    %c0_i32_0 = arith.constant 0 : i32
    %c0_i32_1 = arith.constant 0 : i32
    return %c0_i32, %c0_i32_0 : i32, i32
  }
  func.func @transform_4(%arg0: i32) -> (i32, i32) {
    %c0_i32 = arith.constant 0 : i32
    %c0_i32_0 = arith.constant 0 : i32
    %c0_i32_1 = arith.constant 0 : i32
    return %c0_i32, %c0_i32_0 : i32, i32
  }
  func.func @transform_5(%arg0: i32) -> (i32, i32) {
    %c0_i32 = arith.constant 0 : i32
    %c0_i32_0 = arith.constant 0 : i32
    return %arg0, %c0_i32 : i32, i32
  }
}

</mosaic_0001>

<llo_original>
// kernel: feed_forward.1
$region0: #{feed_forward.1}
  #allocation0 [shape = 'u32[]', space=smem, size = 0x4, offset = 0x4, fixed_abs, tag = 'smem constant byte address 0x4 - core index']
  #allocation1 [shape = 'u32[72,128]{1,0:T(1,128)}', space=vmem, size = 0x9000, scoped, tag = 'internal scratch']
  %s0 = inlined_call_operand.vmem [shape: f32[8,128], index: 0, kind: input, shape index: {}]
  %s1 = inlined_call_operand.hbm [shape: bf16[128,512], index: 1, kind: input, shape index: {}]
  %s2 = inlined_call_operand.vmem [shape: f32[1,512], index: 2, kind: input, shape index: {}]
  %s3 = inlined_call_operand.hbm [shape: bf16[512,128], index: 3, kind: input, shape index: {}]
  %s4 = inlined_call_operand.vmem [shape: f32[1,128], index: 4, kind: input, shape index: {}]
  %s5 = inlined_call_operand.vmem [shape: f32[8,128], index: 5, kind: output, shape index: {}]
  %s6 = sld [smem:[#allocation0]]
  $region38: #{feed_forward.1} parent=0
    _
  %s8 = ssub.s32 1, %s6
  %s9 = scalar_select 0, %s8, %s6
  $region1: #{feed_forward.1} parent=0
    #allocation2 [shape = 'u8[131072]{0}', space=vmem, size = 0x20000, scoped, tag = 'input window, operand 1, single buffered']
    #allocation3 [shape = 's32[1]{0}', space=sflag, size = 0x4, scoped, tag = 'scoped memory for feed_forward.1']
    #allocation4 [shape = 'u8[131072]{0}', space=vmem, size = 0x20000, scoped, tag = 'input window, operand 3, single buffered']
    #allocation5 [shape = 's32[1]{0}', space=sflag, size = 0x4, scoped, tag = 'scoped memory for feed_forward.1']
    %10 = vsyncpa [#allocation3], 0
    %11 = vsyncpa [#allocation5], 0
    // Predicated region
    $region2: #{feed_forward.1} parent=1 // pred_check
      _
    $region3: #{feed_forward.1} parent=1 // pred_check_branch
      %13 = sbr.rel (0) target = $region5
    $region4: #{feed_forward.1} parent=1 // pred_region
      _
    $region5: #{feed_forward.1} parent=1 // pred_fallthru
      _
    // Predicated region
    $region6: #{feed_forward.1} parent=1 // pred_check
      _
    $region7: #{feed_forward.1} parent=1 // pred_check_branch
      %15 = sbr.rel (0) target = $region9
    $region8: #{feed_forward.1} parent=1 // pred_region
      %17 = vsyncadd [#allocation3], 0
      %s18 = sshll.u32 %s1, 4
      %s19 = int_to_ptr.hbm [resolvable:$true] %s18
      %s20 = sshll.u32 [#allocation2], 4
      %s21 = int_to_ptr.vmem [resolvable:$true] %s20
      %26 = dma.hbm_to_vmem [thread:$0]  %s19, 4096, %s21, [#allocation3], 256, 256, 16
    $region9: #{feed_forward.1} parent=1 // pred_fallthru
      _
    // Predicated region
    $region10: #{feed_forward.1} parent=1 // pred_check
      _
    $region11: #{feed_forward.1} parent=1 // pred_check_branch
      %28 = sbr.rel (0) target = $region13
    $region12: #{feed_forward.1} parent=1 // pred_region
      _
    $region13: #{feed_forward.1} parent=1 // pred_fallthru
      _
    // Predicated region
    $region14: #{feed_forward.1} parent=1 // pred_check
      _
    $region15: #{feed_forward.1} parent=1 // pred_check_branch
      %30 = sbr.rel (0) target = $region17
    $region16: #{feed_forward.1} parent=1 // pred_region
      %32 = vsyncadd [#allocation5], 0
      %s33 = sshll.u32 %s3, 4
      %s34 = int_to_ptr.hbm [resolvable:$true] %s33
      %s35 = sshll.u32 [#allocation4], 4
      %s36 = int_to_ptr.vmem [resolvable:$true] %s35
      %41 = dma.hbm_to_vmem [thread:$0]  %s34, 4096, %s36, [#allocation5], 64, 64, 4
    $region17: #{feed_forward.1} parent=1 // pred_fallthru
      _
    // Predicated region
    $region18: #{feed_forward.1} parent=1 // pred_check
      _
    $region19: #{feed_forward.1} parent=1 // pred_check_branch
      %43 = sbr.rel (0) target = $region21
    $region20: #{feed_forward.1} parent=1 // pred_region
      _
    $region21: #{feed_forward.1} parent=1 // pred_fallthru
      _
    // Predicated region
    $region22: #{feed_forward.1} parent=1 // pred_check
      _
    $region23: #{feed_forward.1} parent=1 // pred_check_branch
      %45 = sbr.rel (0) target = $region25
    $region24: #{feed_forward.1} parent=1 // pred_region
      %47 = dma.done [#allocation3], 4096
    $region25: #{feed_forward.1} parent=1 // pred_fallthru
      _
    // Predicated region
    $region26: #{feed_forward.1} parent=1 // pred_check
      _
    $region27: #{feed_forward.1} parent=1 // pred_check_branch
      %49 = sbr.rel (0) target = $region29
    $region28: #{feed_forward.1} parent=1 // pred_region
      %51 = dma.done [#allocation5], 4096
    $region29: #{feed_forward.1} parent=1 // pred_fallthru
      _
    %v52 = vld [vmem:[%s0] sm:$0xff]
    %v53 = vpack.c.bf16 %v52, %v52
    %v54 = vld [vmem:[#allocation2] sm:$0xff]
    %v55 = vld [vmem:[#allocation2 + $0x8] sm:$0xff]
    %v56 = vld [vmem:[#allocation2 + $0x10] sm:$0xff]
    %v57 = vld [vmem:[#allocation2 + $0x18] sm:$0xff]
    %v58 = vld [vmem:[#allocation2 + $0x20] sm:$0xff]
    %v59 = vld [vmem:[#allocation2 + $0x28] sm:$0xff]
    %v60 = vld [vmem:[#allocation2 + $0x30] sm:$0xff]
    %v61 = vld [vmem:[#allocation2 + $0x38] sm:$0xff]
    %v62 = vld [vmem:[#allocation2 + $0x40] sm:$0xff]
    %v63 = vld [vmem:[#allocation2 + $0x48] sm:$0xff]
    %v64 = vld [vmem:[#allocation2 + $0x50] sm:$0xff]
    %v65 = vld [vmem:[#allocation2 + $0x58] sm:$0xff]
    %v66 = vld [vmem:[#allocation2 + $0x60] sm:$0xff]
    %v67 = vld [vmem:[#allocation2 + $0x68] sm:$0xff]
    %v68 = vld [vmem:[#allocation2 + $0x70] sm:$0xff]
    %v69 = vld [vmem:[#allocation2 + $0x78] sm:$0xff]
    %v70 = vld [vmem:[#allocation2 + $0x80] sm:$0xff]
    %v71 = vld [vmem:[#allocation2 + $0x88] sm:$0xff]
    %v72 = vld [vmem:[#allocation2 + $0x90] sm:$0xff]
    %v73 = vld [vmem:[#allocation2 + $0x98] sm:$0xff]
    %v74 = vld [vmem:[#allocation2 + $0xa0] sm:$0xff]
    %v75 = vld [vmem:[#allocation2 + $0xa8] sm:$0xff]
    %v76 = vld [vmem:[#allocation2 + $0xb0] sm:$0xff]
    %v77 = vld [vmem:[#allocation2 + $0xb8] sm:$0xff]
    %v78 = vld [vmem:[#allocation2 + $0xc0] sm:$0xff]
    %v79 = vld [vmem:[#allocation2 + $0xc8] sm:$0xff]
    %v80 = vld [vmem:[#allocation2 + $0xd0] sm:$0xff]
    %v81 = vld [vmem:[#allocation2 + $0xd8] sm:$0xff]
    %v82 = vld [vmem:[#allocation2 + $0xe0] sm:$0xff]
    %v83 = vld [vmem:[#allocation2 + $0xe8] sm:$0xff]
    %v84 = vld [vmem:[#allocation2 + $0xf0] sm:$0xff]
    %v85 = vld [vmem:[#allocation2 + $0xf8] sm:$0xff]
    %v86 = vld [vmem:[%s2] sm:$0xf]
    %v88 = vperm.slane %v86, 0
    %v89 = vperm.slane %v86, 1
    %v90 = vperm.slane %v86, 2
    %v91 = vperm.slane %v86, 3
    %v128 = vunpack.c.l.b16 %v54
    %v129 = vunpack.c.h.b16 %v54
    %v130 = vunpack.c.l.b16 %v55
    %v131 = vunpack.c.h.b16 %v55
    %v132 = vunpack.c.l.b16 %v56
    %v133 = vunpack.c.h.b16 %v56
    %v134 = vunpack.c.l.b16 %v57
    %v135 = vunpack.c.h.b16 %v57
    %v136 = vunpack.c.l.b16 %v58
    %v137 = vunpack.c.h.b16 %v58
    %v138 = vunpack.c.l.b16 %v59
    %v139 = vunpack.c.h.b16 %v59
    %v140 = vunpack.c.l.b16 %v60
    %v141 = vunpack.c.h.b16 %v60
    %v142 = vunpack.c.l.b16 %v61
    %v143 = vunpack.c.h.b16 %v61
    %v144 = vunpack.c.l.b16 %v62
    %v145 = vunpack.c.h.b16 %v62
    %v146 = vunpack.c.l.b16 %v63
    %v147 = vunpack.c.h.b16 %v63
    %v148 = vunpack.c.l.b16 %v64
    %v149 = vunpack.c.h.b16 %v64
    %v150 = vunpack.c.l.b16 %v65
    %v151 = vunpack.c.h.b16 %v65
    %v152 = vunpack.c.l.b16 %v66
    %v153 = vunpack.c.h.b16 %v66
    %v154 = vunpack.c.l.b16 %v67
    %v155 = vunpack.c.h.b16 %v67
    %v156 = vunpack.c.l.b16 %v68
    %v157 = vunpack.c.h.b16 %v68
    %v158 = vunpack.c.l.b16 %v69
    %v159 = vunpack.c.h.b16 %v69
    %v160 = vunpack.c.l.b16 %v70
    %v161 = vunpack.c.h.b16 %v70
    %v162 = vunpack.c.l.b16 %v71
    %v163 = vunpack.c.h.b16 %v71
    %v164 = vunpack.c.l.b16 %v72
    %v165 = vunpack.c.h.b16 %v72
    %v166 = vunpack.c.l.b16 %v73
    %v167 = vunpack.c.h.b16 %v73
    %v168 = vunpack.c.l.b16 %v74
    %v169 = vunpack.c.h.b16 %v74
    %v170 = vunpack.c.l.b16 %v75
    %v171 = vunpack.c.h.b16 %v75
    %v172 = vunpack.c.l.b16 %v76
    %v173 = vunpack.c.h.b16 %v76
    %v174 = vunpack.c.l.b16 %v77
    %v175 = vunpack.c.h.b16 %v77
    %v176 = vunpack.c.l.b16 %v78
    %v177 = vunpack.c.h.b16 %v78
    %v178 = vunpack.c.l.b16 %v79
    %v179 = vunpack.c.h.b16 %v79
    %v180 = vunpack.c.l.b16 %v80
    %v181 = vunpack.c.h.b16 %v80
    %v182 = vunpack.c.l.b16 %v81
    %v183 = vunpack.c.h.b16 %v81
    %v184 = vunpack.c.l.b16 %v82
    %v185 = vunpack.c.h.b16 %v82
    %v186 = vunpack.c.l.b16 %v83
    %v187 = vunpack.c.h.b16 %v83
    %v188 = vunpack.c.l.b16 %v84
    %v189 = vunpack.c.h.b16 %v84
    %v190 = vunpack.c.l.b16 %v85
    %v191 = vunpack.c.h.b16 %v85
    %v192 = vpack.c.b16 %v132, %v128
    %v193 = vpack.c.b16 %v133, %v129
    %v194 = vpack.c.b16 %v134, %v130
    %v195 = vpack.c.b16 %v135, %v131
    %v196 = vpack.c.b16 %v140, %v136
    %v197 = vpack.c.b16 %v141, %v137
    %v198 = vpack.c.b16 %v142, %v138
    %v199 = vpack.c.b16 %v143, %v139
    %v200 = vpack.c.b16 %v148, %v144
    %v201 = vpack.c.b16 %v149, %v145
    %v202 = vpack.c.b16 %v150, %v146
    %v203 = vpack.c.b16 %v151, %v147
    %v204 = vpack.c.b16 %v156, %v152
    %v205 = vpack.c.b16 %v157, %v153
    %v206 = vpack.c.b16 %v158, %v154
    %v207 = vpack.c.b16 %v159, %v155
    %v208 = vpack.c.b16 %v164, %v160
    %v209 = vpack.c.b16 %v165, %v161
    %v210 = vpack.c.b16 %v166, %v162
    %v211 = vpack.c.b16 %v167, %v163
    %v212 = vpack.c.b16 %v172, %v168
    %v213 = vpack.c.b16 %v173, %v169
    %v214 = vpack.c.b16 %v174, %v170
    %v215 = vpack.c.b16 %v175, %v171
    %v216 = vpack.c.b16 %v180, %v176
    %v217 = vpack.c.b16 %v181, %v177
    %v218 = vpack.c.b16 %v182, %v178
    %v219 = vpack.c.b16 %v183, %v179
    %v220 = vpack.c.b16 %v188, %v184
    %v221 = vpack.c.b16 %v189, %v185
    %v222 = vpack.c.b16 %v190, %v186
    %v223 = vpack.c.b16 %v191, %v187
    %256 = vmatpush.bf16.msra.mxu0 %v220
    %257 = vmatpush.bf16.msra.mxu0 %v216
    %258 = vmatpush.bf16.msra.mxu0 %v212
    %259 = vmatpush.bf16.msra.mxu0 %v208
    %260 = vmatpush.bf16.msra.mxu0 %v204
    %261 = vmatpush.bf16.msra.mxu0 %v200
    %262 = vmatpush.bf16.msra.mxu0 %v196
    %263 = vmatpush.bf16.msra.mxu0 %v192
    %264 = vmatmul.bf16.gmra.mxu0 %v53
    %v265 = vpop.f32.mrf.mxu0
    %v266 = vadd.f32 %v88, %v265
    %v267 = vpop.f32.mrf.mxu0
    %268 = vdwg.mxu0
    %269 = vmatpush.bf16.msra.mxu0 %v221
    %270 = vmatpush.bf16.msra.mxu0 %v217
    %271 = vmatpush.bf16.msra.mxu0 %v213
    %272 = vmatpush.bf16.msra.mxu0 %v209
    %273 = vmatpush.bf16.msra.mxu0 %v205
    %274 = vmatpush.bf16.msra.mxu0 %v201
    %275 = vmatpush.bf16.msra.mxu0 %v197
    %276 = vmatpush.bf16.msra.mxu0 %v193
    %277 = vmatmul.bf16.gmra.mxu0 %v53
    %v278 = vpop.f32.mrf.mxu0
    %v279 = vadd.f32 %v89, %v278
    %v280 = vpop.f32.mrf.mxu0
    %281 = vdwg.mxu0
    %282 = vmatpush.bf16.msra.mxu0 %v222
    %283 = vmatpush.bf16.msra.mxu0 %v218
    %284 = vmatpush.bf16.msra.mxu0 %v214
    %285 = vmatpush.bf16.msra.mxu0 %v210
    %286 = vmatpush.bf16.msra.mxu0 %v206
    %287 = vmatpush.bf16.msra.mxu0 %v202
    %288 = vmatpush.bf16.msra.mxu0 %v198
    %289 = vmatpush.bf16.msra.mxu0 %v194
    %290 = vmatmul.bf16.gmra.mxu0 %v53
    %v291 = vpop.f32.mrf.mxu0
    %v292 = vadd.f32 %v90, %v291
    %v293 = vpop.f32.mrf.mxu0
    %294 = vdwg.mxu0
    %295 = vmatpush.bf16.msra.mxu0 %v223
    %296 = vmatpush.bf16.msra.mxu0 %v219
    %297 = vmatpush.bf16.msra.mxu0 %v215
    %298 = vmatpush.bf16.msra.mxu0 %v211
    %299 = vmatpush.bf16.msra.mxu0 %v207
    %300 = vmatpush.bf16.msra.mxu0 %v203
    %301 = vmatpush.bf16.msra.mxu0 %v199
    %302 = vmatpush.bf16.msra.mxu0 %v195
    %303 = vmatmul.bf16.gmra.mxu0 %v53
    %v304 = vpop.f32.mrf.mxu0
    %v305 = vadd.f32 %v91, %v304
    %v306 = vpop.f32.mrf.mxu0
    %307 = vdwg.mxu0
    %v308 = vmax.f32 %v266, 0.0
    %v309 = vmax.f32 %v279, 0.0
    %v310 = vmax.f32 %v292, 0.0
    %v311 = vmax.f32 %v305, 0.0
    %v312 = vpack.c.bf16 %v308, %v308
    %v313 = vpack.c.bf16 %v309, %v309
    %v314 = vpack.c.bf16 %v310, %v310
    %v315 = vpack.c.bf16 %v311, %v311
    %v316 = vld [vmem:[#allocation4] sm:$0xf]
    %v317 = vld [vmem:[#allocation4 + $0x4] sm:$0xf]
    %v318 = vld [vmem:[#allocation4 + $0x8] sm:$0xf]
    %v319 = vld [vmem:[#allocation4 + $0xc] sm:$0xf]
    %v320 = vld [vmem:[#allocation4 + $0x10] sm:$0xf]
    %v321 = vld [vmem:[#allocation4 + $0x14] sm:$0xf]
    %v322 = vld [vmem:[#allocation4 + $0x18] sm:$0xf]
    %v323 = vld [vmem:[#allocation4 + $0x1c] sm:$0xf]
    %v324 = vld [vmem:[#allocation4 + $0x20] sm:$0xf]
    %v325 = vld [vmem:[#allocation4 + $0x24] sm:$0xf]
    %v326 = vld [vmem:[#allocation4 + $0x28] sm:$0xf]
    %v327 = vld [vmem:[#allocation4 + $0x2c] sm:$0xf]
    %v328 = vld [vmem:[#allocation4 + $0x30] sm:$0xf]
    %v329 = vld [vmem:[#allocation4 + $0x34] sm:$0xf]
    %v330 = vld [vmem:[#allocation4 + $0x38] sm:$0xf]
    %v331 = vld [vmem:[#allocation4 + $0x3c] sm:$0xf]
    %v332 = vld [vmem:[#allocation4 + $0x40] sm:$0xf]
    %v333 = vld [vmem:[#allocation4 + $0x44] sm:$0xf]
    %v334 = vld [vmem:[#allocation4 + $0x48] sm:$0xf]
    %v335 = vld [vmem:[#allocation4 + $0x4c] sm:$0xf]
    %v336 = vld [vmem:[#allocation4 + $0x50] sm:$0xf]
    %v337 = vld [vmem:[#allocation4 + $0x54] sm:$0xf]
    %v338 = vld [vmem:[#allocation4 + $0x58] sm:$0xf]
    %v339 = vld [vmem:[#allocation4 + $0x5c] sm:$0xf]
    %v340 = vld [vmem:[#allocation4 + $0x60] sm:$0xf]
    %v341 = vld [vmem:[#allocation4 + $0x64] sm:$0xf]
    %v342 = vld [vmem:[#allocation4 + $0x68] sm:$0xf]
    %v343 = vld [vmem:[#allocation4 + $0x6c] sm:$0xf]
    %v344 = vld [vmem:[#allocation4 + $0x70] sm:$0xf]
    %v345 = vld [vmem:[#allocation4 + $0x74] sm:$0xf]
    %v346 = vld [vmem:[#allocation4 + $0x78] sm:$0xf]
    %v347 = vld [vmem:[#allocation4 + $0x7c] sm:$0xf]
    %v348 = vld [vmem:[#allocation4 + $0x80] sm:$0xf]
    %v349 = vld [vmem:[#allocation4 + $0x84] sm:$0xf]
    %v350 = vld [vmem:[#allocation4 + $0x88] sm:$0xf]
    %v351 = vld [vmem:[#allocation4 + $0x8c] sm:$0xf]
    %v352 = vld [vmem:[#allocation4 + $0x90] sm:$0xf]
    %v353 = vld [vmem:[#allocation4 + $0x94] sm:$0xf]
    %v354 = vld [vmem:[#allocation4 + $0x98] sm:$0xf]
    %v355 = vld [vmem:[#allocation4 + $0x9c] sm:$0xf]
    %v356 = vld [vmem:[#allocation4 + $0xa0] sm:$0xf]
    %v357 = vld [vmem:[#allocation4 + $0xa4] sm:$0xf]
    %v358 = vld [vmem:[#allocation4 + $0xa8] sm:$0xf]
    %v359 = vld [vmem:[#allocation4 + $0xac] sm:$0xf]
    %v360 = vld [vmem:[#allocation4 + $0xb0] sm:$0xf]
    %v361 = vld [vmem:[#allocation4 + $0xb4] sm:$0xf]
    %v362 = vld [vmem:[#allocation4 + $0xb8] sm:$0xf]
    %v363 = vld [vmem:[#allocation4 + $0xbc] sm:$0xf]
    %v364 = vld [vmem:[#allocation4 + $0xc0] sm:$0xf]
    %v365 = vld [vmem:[#allocation4 + $0xc4] sm:$0xf]
    %v366 = vld [vmem:[#allocation4 + $0xc8] sm:$0xf]
    %v367 = vld [vmem:[#allocation4 + $0xcc] sm:$0xf]
    %v368 = vld [vmem:[#allocation4 + $0xd0] sm:$0xf]
    %v369 = vld [vmem:[#allocation4 + $0xd4] sm:$0xf]
    %v370 = vld [vmem:[#allocation4 + $0xd8] sm:$0xf]
    %v371 = vld [vmem:[#allocation4 + $0xdc] sm:$0xf]
    %v372 = vld [vmem:[#allocation4 + $0xe0] sm:$0xf]
    %v373 = vld [vmem:[#allocation4 + $0xe4] sm:$0xf]
    %v374 = vld [vmem:[#allocation4 + $0xe8] sm:$0xf]
    %v375 = vld [vmem:[#allocation4 + $0xec] sm:$0xf]
    %v376 = vld [vmem:[#allocation4 + $0xf0] sm:$0xf]
    %v377 = vld [vmem:[#allocation4 + $0xf4] sm:$0xf]
    %v378 = vld [vmem:[#allocation4 + $0xf8] sm:$0xf]
    %v379 = vld [vmem:[#allocation4 + $0xfc] sm:$0xf]
    %v380 = vld [vmem:[%s4] sm:$0x1]
    %v382 = vperm.slane %v380, 0
    %v448 = vunpack.c.l.b16 %v316
    %v449 = vunpack.c.l.b16 %v317
    %v450 = vunpack.c.l.b16 %v318
    %v451 = vunpack.c.l.b16 %v319
    %v452 = vunpack.c.l.b16 %v320
    %v453 = vunpack.c.l.b16 %v321
    %v454 = vunpack.c.l.b16 %v322
    %v455 = vunpack.c.l.b16 %v323
    %v456 = vunpack.c.l.b16 %v324
    %v457 = vunpack.c.l.b16 %v325
    %v458 = vunpack.c.l.b16 %v326
    %v459 = vunpack.c.l.b16 %v327
    %v460 = vunpack.c.l.b16 %v328
    %v461 = vunpack.c.l.b16 %v329
    %v462 = vunpack.c.l.b16 %v330
    %v463 = vunpack.c.l.b16 %v331
    %v464 = vunpack.c.l.b16 %v332
    %v465 = vunpack.c.l.b16 %v333
    %v466 = vunpack.c.l.b16 %v334
    %v467 = vunpack.c.l.b16 %v335
    %v468 = vunpack.c.l.b16 %v336
    %v469 = vunpack.c.l.b16 %v337
    %v470 = vunpack.c.l.b16 %v338
    %v471 = vunpack.c.l.b16 %v339
    %v472 = vunpack.c.l.b16 %v340
    %v473 = vunpack.c.l.b16 %v341
    %v474 = vunpack.c.l.b16 %v342
    %v475 = vunpack.c.l.b16 %v343
    %v476 = vunpack.c.l.b16 %v344
    %v477 = vunpack.c.l.b16 %v345
    %v478 = vunpack.c.l.b16 %v346
    %v479 = vunpack.c.l.b16 %v347
    %v480 = vunpack.c.l.b16 %v348
    %v481 = vunpack.c.l.b16 %v349
    %v482 = vunpack.c.l.b16 %v350
    %v483 = vunpack.c.l.b16 %v351
    %v484 = vunpack.c.l.b16 %v352
    %v485 = vunpack.c.l.b16 %v353
    %v486 = vunpack.c.l.b16 %v354
    %v487 = vunpack.c.l.b16 %v355
    %v488 = vunpack.c.l.b16 %v356
    %v489 = vunpack.c.l.b16 %v357
    %v490 = vunpack.c.l.b16 %v358
    %v491 = vunpack.c.l.b16 %v359
    %v492 = vunpack.c.l.b16 %v360
    %v493 = vunpack.c.l.b16 %v361
    %v494 = vunpack.c.l.b16 %v362
    %v495 = vunpack.c.l.b16 %v363
    %v496 = vunpack.c.l.b16 %v364
    %v497 = vunpack.c.l.b16 %v365
    %v498 = vunpack.c.l.b16 %v366
    %v499 = vunpack.c.l.b16 %v367
    %v500 = vunpack.c.l.b16 %v368
    %v501 = vunpack.c.l.b16 %v369
    %v502 = vunpack.c.l.b16 %v370
    %v503 = vunpack.c.l.b16 %v371
    %v504 = vunpack.c.l.b16 %v372
    %v505 = vunpack.c.l.b16 %v373
    %v506 = vunpack.c.l.b16 %v374
    %v507 = vunpack.c.l.b16 %v375
    %v508 = vunpack.c.l.b16 %v376
    %v509 = vunpack.c.l.b16 %v377
    %v510 = vunpack.c.l.b16 %v378
    %v511 = vunpack.c.l.b16 %v379
    %v512 = vpack.c.b16 %v449, %v448
    %v513 = vpack.c.b16 %v451, %v450
    %v514 = vpack.c.b16 %v453, %v452
    %v515 = vpack.c.b16 %v455, %v454
    %v516 = vpack.c.b16 %v457, %v456
    %v517 = vpack.c.b16 %v459, %v458
    %v518 = vpack.c.b16 %v461, %v460
    %v519 = vpack.c.b16 %v463, %v462
    %v520 = vpack.c.b16 %v465, %v464
    %v521 = vpack.c.b16 %v467, %v466
    %v522 = vpack.c.b16 %v469, %v468
    %v523 = vpack.c.b16 %v471, %v470
    %v524 = vpack.c.b16 %v473, %v472
    %v525 = vpack.c.b16 %v475, %v474
    %v526 = vpack.c.b16 %v477, %v476
    %v527 = vpack.c.b16 %v479, %v478
    %v528 = vpack.c.b16 %v481, %v480
    %v529 = vpack.c.b16 %v483, %v482
    %v530 = vpack.c.b16 %v485, %v484
    %v531 = vpack.c.b16 %v487, %v486
    %v532 = vpack.c.b16 %v489, %v488
    %v533 = vpack.c.b16 %v491, %v490
    %v534 = vpack.c.b16 %v493, %v492
    %v535 = vpack.c.b16 %v495, %v494
    %v536 = vpack.c.b16 %v497, %v496
    %v537 = vpack.c.b16 %v499, %v498
    %v538 = vpack.c.b16 %v501, %v500
    %v539 = vpack.c.b16 %v503, %v502
    %v540 = vpack.c.b16 %v505, %v504
    %v541 = vpack.c.b16 %v507, %v506
    %v542 = vpack.c.b16 %v509, %v508
    %v543 = vpack.c.b16 %v511, %v510
    %576 = vmatpush.bf16.msra.mxu0 %v519
    %577 = vmatpush.bf16.msra.mxu0 %v518
    %578 = vmatpush.bf16.msra.mxu0 %v517
    %579 = vmatpush.bf16.msra.mxu0 %v516
    %580 = vmatpush.bf16.msra.mxu0 %v515
    %581 = vmatpush.bf16.msra.mxu0 %v514
    %582 = vmatpush.bf16.msra.mxu0 %v513
    %583 = vmatpush.bf16.msra.mxu0 %v512
    %584 = vmatmul.bf16.gmra.mxu0 %v312
    %v585 = vpop.f32.mrf.mxu0
    %v586 = vadd.f32 %v382, %v585
    %v587 = vpop.f32.mrf.mxu0
    %588 = vdwg.mxu0
    %589 = vmatpush.bf16.msra.mxu0 %v527
    %590 = vmatpush.bf16.msra.mxu0 %v526
    %591 = vmatpush.bf16.msra.mxu0 %v525
    %592 = vmatpush.bf16.msra.mxu0 %v524
    %593 = vmatpush.bf16.msra.mxu0 %v523
    %594 = vmatpush.bf16.msra.mxu0 %v522
    %595 = vmatpush.bf16.msra.mxu0 %v521
    %596 = vmatpush.bf16.msra.mxu0 %v520
    %597 = vmatmul.bf16.gmra.mxu0 %v313
    %v598 = vpop.f32.mrf.mxu0
    %v599 = vadd.f32 %v586, %v598
    %v600 = vpop.f32.mrf.mxu0
    %601 = vdwg.mxu0
    %602 = vmatpush.bf16.msra.mxu0 %v535
    %603 = vmatpush.bf16.msra.mxu0 %v534
    %604 = vmatpush.bf16.msra.mxu0 %v533
    %605 = vmatpush.bf16.msra.mxu0 %v532
    %606 = vmatpush.bf16.msra.mxu0 %v531
    %607 = vmatpush.bf16.msra.mxu0 %v530
    %608 = vmatpush.bf16.msra.mxu0 %v529
    %609 = vmatpush.bf16.msra.mxu0 %v528
    %610 = vmatmul.bf16.gmra.mxu0 %v314
    %v611 = vpop.f32.mrf.mxu0
    %v612 = vadd.f32 %v599, %v611
    %v613 = vpop.f32.mrf.mxu0
    %614 = vdwg.mxu0
    %615 = vmatpush.bf16.msra.mxu0 %v543
    %616 = vmatpush.bf16.msra.mxu0 %v542
    %617 = vmatpush.bf16.msra.mxu0 %v541
    %618 = vmatpush.bf16.msra.mxu0 %v540
    %619 = vmatpush.bf16.msra.mxu0 %v539
    %620 = vmatpush.bf16.msra.mxu0 %v538
    %621 = vmatpush.bf16.msra.mxu0 %v537
    %622 = vmatpush.bf16.msra.mxu0 %v536
    %623 = vmatmul.bf16.gmra.mxu0 %v315
    %v624 = vpop.f32.mrf.mxu0
    %v625 = vadd.f32 %v612, %v624
    %v626 = vpop.f32.mrf.mxu0
    %627 = vdwg.mxu0
    %628 = vst [vmem:[%s5] sm:$0xff] %v625
    // Predicated region
    $region30: #{feed_forward.1} parent=1 // pred_check
      _
    $region31: #{feed_forward.1} parent=1 // pred_check_branch
      %630 = sbr.rel (0) target = $region33
    $region32: #{feed_forward.1} parent=1 // pred_region
      _
    $region33: #{feed_forward.1} parent=1 // pred_fallthru
      _
    // Predicated region
    $region34: #{feed_forward.1} parent=1 // pred_check
      _
    $region35: #{feed_forward.1} parent=1 // pred_check_branch
      %632 = sbr.rel (0) target = $region37
    $region36: #{feed_forward.1} parent=1 // pred_region
      _
    $region37: #{feed_forward.1} parent=1 // pred_fallthru
      _
    %633 = vsyncpa [#allocation3], 1
    %634 = vsyncpa [#allocation5], 1

</llo_original>
